<compile_context>
chip_gen: v7x
topology: tpu7x:2x2x1
jax: 0.10.0
libtpu: 0.0.40
codegen_flags: <defaults>
</compile_context>

<pallas_src>
import jax
import jax.numpy as jnp
from jax.experimental import pallas as pl
from jax.experimental.pallas import tpu as pltpu

KH = KW = 3
STRIDE = 1
PAD = 1
DIL = 1
DEFORMABLE_GROUPS = 1


def _round_up(x, m):
    return (x + m - 1) // m * m


# ---------------------------------------------------------------------------
# Generation-aware configuration (v7x: 2 TensorCores, 64 MiB VMEM/TC; v5e/v6e: 1 TC,
# 128 MiB VMEM).
# ---------------------------------------------------------------------------
def _tpu_config():
    kind = ""
    try:
        kind = (getattr(jax.devices()[0], "device_kind", "") or "").lower()
    except Exception:
        pass
    two_tc = ("v7" in kind) or ("tpu7" in kind) or ("tpu 7" in kind)
    if two_tc:
        return dict(two_tc=True, vmem_cap=52 << 20, tm_max=512, single_buffer_weights=True)
    return dict(two_tc=False, vmem_cap=100 << 20, tm_max=1024, single_buffer_weights=False)


def _plan_vmem_bytes(tm, kd, npad, weight_bufs):
    cols = 2 * tm * kd * 2              # double-buffered bf16 cols tiles
    outb = 2 * tm * npad * 4            # double-buffered f32 output tiles
    wgt = weight_bufs * kd * npad * 2   # resident bf16 weights
    bia = weight_bufs * 8 * npad * 4    # bias, padded to 8 sublanes
    return cols + outb + wgt + bia


def _fit_tm(cfg, kd, npad):
    """Largest row tile fitting the per-generation VMEM budget (30% margin + 4 MiB)."""
    wbufs = 1 if cfg["single_buffer_weights"] else 2
    tm = cfg["tm_max"]
    while tm > 64:
        need = int(1.3 * _plan_vmem_bytes(tm, kd, npad, wbufs)) + (4 << 20)
        if need <= cfg["vmem_cap"]:
            break
        tm = max(64, (tm // 2 // 8) * 8)
    need = int(1.3 * _plan_vmem_bytes(tm, kd, npad, wbufs)) + (4 << 20)
    return tm, int(min(max(need, 32 << 20), cfg["vmem_cap"]))


def _choose_tiles(M, tm_fit, cfg):
    """(tm, M_pad): rows multiple of 8; >=2 grid steps only on 2-TC chips with >=128 rows/half."""
    M8 = _round_up(M, 8)
    if M8 <= tm_fit:
        if cfg["two_tc"]:
            half = _round_up((M8 + 1) // 2, 8)
            if half >= 128:
                return half, 2 * half
        return M8, M8
    return tm_fit, _round_up(M, tm_fit)


# ---------------------------------------------------------------------------
# Pallas kernel B: matmul + bias (mask / boundary factor already folded into cols).
# ---------------------------------------------------------------------------
def _matmul_bias_kernel(cols_ref, w_ref, b_ref, o_ref):
    o_ref[...] = (jnp.dot(cols_ref[...], w_ref[...],
                          preferred_element_type=jnp.float32) + b_ref[...])


def dcn_matmul_bias(cols, w2d, bias, cfg):
    """out[:M, :N] = cols @ w2d + bias. bf16 operands, f32 accumulation / output."""
    M, Kd = cols.shape
    N = w2d.shape[1]
    Npad = _round_up(N, 128)            # lane-dense output -> unmasked vector stores
    Kpad = _round_up(Kd, 128)           # lane-dense cols loads / aligned bf16 weight rows
    if Kpad != Kd:
        cols = jnp.pad(cols, ((0, 0), (0, Kpad - Kd)))
        w2d = jnp.pad(w2d, ((0, Kpad - Kd), (0, 0)))
    if Npad != N:
        w2d = jnp.pad(w2d, ((0, 0), (0, Npad - N)))
        bias = jnp.pad(bias, ((0, Npad - N),))

    tm_fit, vmem_limit = _fit_tm(cfg, Kpad, Npad)
    tm, M_pad = _choose_tiles(M, tm_fit, cfg)
    if M_pad != M:                      # only pad rows when unavoidable
        cols = jnp.pad(cols, ((0, M_pad - M), (0, 0)))

    cols = cols.astype(jnp.bfloat16)    # no-op if glue already emitted bf16
    w_bf = w2d.astype(jnp.bfloat16)
    bias2d = bias.astype(jnp.float32).reshape(1, Npad)

    w_spec = pl.BlockSpec((Kpad, Npad), lambda i: (0, 0))
    b_spec = pl.BlockSpec((1, Npad), lambda i: (0, 0))
    if cfg["single_buffer_weights"]:
        # Constant index_map -> one buffer is enough; halves the weight footprint on v7x.
        try:
            w_spec = pl.BlockSpec((Kpad, Npad), lambda i: (0, 0),
                                  pipeline_mode=pl.Buffered(1))
            b_spec = pl.BlockSpec((1, Npad), lambda i: (0, 0),
                                  pipeline_mode=pl.Buffered(1))
        except (TypeError, AttributeError):
            pass

    out = pl.pallas_call(
        _matmul_bias_kernel,
        out_shape=jax.ShapeDtypeStruct((M_pad, Npad), jnp.float32),
        grid=(M_pad // tm,),
        in_specs=[pl.BlockSpec((tm, Kpad), lambda i: (i, 0)), w_spec, b_spec],
        out_specs=pl.BlockSpec((tm, Npad), lambda i: (i, 0)),
        compiler_params=pltpu.CompilerParams(
            dimension_semantics=("parallel",),
            vmem_limit_bytes=vmem_limit),
    )(cols, w_bf, bias2d)
    return out[:M, :N]


# ---------------------------------------------------------------------------
# offset/mask conv: tiny 3x3 conv (27 output channels) — XLA conv, channel-last out,
# no im2col materialization.  (Review item 2.)
# ---------------------------------------------------------------------------
def offset_mask_conv(x_nchw, w_om, b_om):
    y = jax.lax.conv_general_dilated(
        x_nchw, w_om, window_strides=(STRIDE, STRIDE),
        padding=((PAD, PAD), (PAD, PAD)), rhs_dilation=(DIL, DIL),
        dimension_numbers=("NCHW", "OIHW", "NHWC"),
        preferred_element_type=jnp.float32)
    return y + b_om.reshape(1, 1, 1, -1)          # (B, Hout, Wout, 3*dg*K)


# ---------------------------------------------------------------------------
# Glue: deformable bilinear im2col, mmcv DCNv2 semantics, vectorized over taps.
# offset_cl: (B,Hout,Wout,2K) with channel 2k = dy_k, 2k+1 = dx_k (mmcv interleave).
# mask_cl:   (B,Hout,Wout,K), fused into the columns here (no mask_exp array).
# Returns bf16 columns (B*Hout*Wout, K*Cin), tap-major.
# ---------------------------------------------------------------------------
def deform_im2col_modulated(x_flat, offset_cl, mask_cl, H, W, kh, kw, stride, pad, dil):
    B, _, C = x_flat.shape
    Hout, Wout = offset_cl.shape[1], offset_cl.shape[2]
    K = kh * kw
    HWo = Hout * Wout
    f32 = jnp.float32

    ki = ((jnp.arange(K) // kw) * dil).astype(f32)      # (K,)
    kj = ((jnp.arange(K) % kw) * dil).astype(f32)
    h_base = jnp.arange(Hout, dtype=f32) * stride - pad
    w_base = jnp.arange(Wout, dtype=f32) * stride - pad

    dy = offset_cl[..., 0::2].astype(f32)               # (B,Hout,Wout,K)
    dx = offset_cl[..., 1::2].astype(f32)
    py = h_base[None, :, None, None] + ki[None, None, None, :] + dy
    px = w_base[None, None, :, None] + kj[None, None, None, :] + dx

    h_low = jnp.floor(py)
    w_low = jnp.floor(px)
    lh = py - h_low
    lw = px - w_low
    hh = 1.0 - lh
    hw = 1.0 - lw
    h_lo = h_low.astype(jnp.int32)
    w_lo = w_low.astype(jnp.int32)
    h_hi = h_lo + 1
    w_hi = w_lo + 1

    def gather(hi, wi):
        valid = (hi >= 0) & (hi <= H - 1) & (wi >= 0) & (wi <= W - 1)
        idx = jnp.clip(hi, 0, H - 1) * W + jnp.clip(wi, 0, W - 1)      # (B,Hout,Wout,K)
        idx = idx.reshape(B, HWo * K, 1)       # width-1: no broadcast index materialization
        v = jnp.take_along_axis(x_flat, idx, axis=1, mode="clip")
        return v * valid.reshape(B, HWo * K, 1).astype(v.dtype)

    w1 = (hh * hw).reshape(B, HWo * K, 1)
    w2 = (hh * lw).reshape(B, HWo * K, 1)
    w3 = (lh * hw).reshape(B, HWo * K, 1)
    w4 = (lh * lw).reshape(B, HWo * K, 1)
    val = (w1 * gather(h_lo, w_lo) + w2 * gather(h_lo, w_hi) +
           w3 * gather(h_hi, w_lo) + w4 * gather(h_hi, w_hi))          # (B,HWo*K,C)

    in_range = (py > -1) & (px > -1) & (py < H) & (px < W)
    scale = in_range.astype(f32) * mask_cl.astype(f32)                 # fused mask
    val = val * scale.reshape(B, HWo * K, 1)
    return val.reshape(B * HWo, K * C).astype(jnp.bfloat16)


# ---------------------------------------------------------------------------
# Full forward (== ModulatedDeformConvWithOff.forward), NCHW in / NCHW out.
# ---------------------------------------------------------------------------
def modulated_deform_conv_with_off(x, params):
    B, Cin, H, W = x.shape
    K = KH * KW
    dgK = DEFORMABLE_GROUPS * K
    cfg = _tpu_config()

    # ---- 1. offset/mask conv (XLA conv, f32, channel-last output) ----
    om = offset_mask_conv(x, params["w_om"], params["b_om"])           # (B,Hout,Wout,3*dgK)
    Hout, Wout = om.shape[1], om.shape[2]

    # Same channel mapping as the PyTorch module + mmcv: chunk(o1,o2,mask) -> cat(o1,o2)
    # -> de-interleave 0::2 / 1::2 (dy/dx per tap).  Do NOT change (valid for dg == 1).
    o1 = om[..., :dgK]
    o2 = om[..., dgK:2 * dgK]
    mask = jax.nn.sigmoid(om[..., 2 * dgK:])
    offset = jnp.concatenate([o1, o2], axis=-1)                        # (B,Hout,Wout,2*dgK)

    # ---- 2. deformable bilinear im2col with fused mask/boundary (XLA glue) ----
    x_flat = x.transpose(0, 2, 3, 1).reshape(B, H * W, Cin)            # one relayout of x
    dcn_cols = deform_im2col_modulated(x_flat, offset, mask,
                                       H, W, KH, KW, STRIDE, PAD, DIL)

    # ---- 3. DCN matmul + bias (Pallas kernel B) ----
    Cout = params["w_dcn"].shape[0]
    w_dcn2 = params["w_dcn"].transpose(2, 3, 1, 0).reshape(K * Cin, Cout)
    out = dcn_matmul_bias(dcn_cols, w_dcn2, params["b_dcn"], cfg)
    return out.reshape(B, Hout, Wout, Cout).transpose(0, 3, 1, 2)      # NCHW


if __name__ == "__main__":
    key = jax.random.PRNGKey(0)
    B, Cin, H, W = 2, 4, 16, 16
    Cout = 8
    k1, k2 = jax.random.split(key, 2)

    x = jax.random.normal(k1, (B, Cin, H, W), dtype=jnp.float32)

    # offset_mask_conv params: zero-initialized (per init_offset() in the module)
    n_om = DEFORMABLE_GROUPS * 3 * KH * KW
    w_om = jnp.zeros((n_om, Cin, KH, KW), jnp.float32)
    b_om = jnp.zeros((n_om,), jnp.float32)

    # dcnv2 params: deterministic uniform(-stdv, stdv), zero bias
    n = Cin * KH * KW
    stdv = 1.0 / (n ** 0.5)
    w_dcn = jax.random.uniform(k2, (Cout, Cin, KH, KW), jnp.float32, -stdv, stdv)
    b_dcn = jnp.zeros((Cout,), jnp.float32)

    params = dict(w_om=w_om, b_om=b_om, w_dcn=w_dcn, b_dcn=b_dcn)

    fwd = jax.jit(modulated_deform_conv_with_off)
    out = jax.block_until_ready(fwd(x, params))
    assert out.shape == (B, Cout, H, W)

    w_h = w_dcn.astype(jnp.bfloat16)
    bias4 = b_dcn.reshape(1, Cout, 1, 1)

    # Check 1: zero-init offset conv => offsets == 0, mask == 0.5, so the forward equals
    # 0.5 * conv2d(x, W, pad=1) + b (reference uses the same bf16 operand precision).
    ref1 = jax.lax.conv_general_dilated(
        (0.5 * x).astype(jnp.bfloat16), w_h, window_strides=(1, 1),
        padding=((1, 1), (1, 1)), dimension_numbers=("NCHW", "OIHW", "NCHW"),
        preferred_element_type=jnp.float32) + bias4
    err1 = float(jnp.max(jnp.abs(out - ref1)))
    assert err1 < 1e-3, err1

    # Check 2: exercise the deformable gather with nonzero INTEGER offsets and a
    # non-trivial mask. Constant dy=-1, dx=+1, mask=0.7 equals 0.7 * conv2d over an
    # input zero-padded (top=2, bottom=0, left=0, right=2).
    K = KH * KW
    Hout = Wout = H
    offset_c = jnp.zeros((B, Hout, Wout, 2 * K), jnp.float32)
    offset_c = offset_c.at[..., 0::2].set(-1.0)   # dy per tap
    offset_c = offset_c.at[..., 1::2].set(1.0)    # dx per tap
    mask_c = jnp.full((B, Hout, Wout, K), 0.7, jnp.float32)
    x_flat = x.transpose(0, 2, 3, 1).reshape(B, H * W, Cin)
    cols2 = deform_im2col_modulated(x_flat, offset_c, mask_c,
                                    H, W, KH, KW, STRIDE, PAD, DIL)
    w_dcn2 = w_dcn.transpose(2, 3, 1, 0).reshape(K * Cin, Cout)
    out2 = dcn_matmul_bias(cols2, w_dcn2, b_dcn, _tpu_config())
    out2 = jax.block_until_ready(
        out2.reshape(B, Hout, Wout, Cout).transpose(0, 3, 1, 2))
    ref2 = jax.lax.conv_general_dilated(
        (0.7 * x).astype(jnp.bfloat16), w_h, window_strides=(1, 1),
        padding=((2, 0), (0, 2)), dimension_numbers=("NCHW", "OIHW", "NCHW"),
        preferred_element_type=jnp.float32) + bias4
    err2 = float(jnp.max(jnp.abs(out2 - ref2)))
    assert err2 < 1e-3, err2

    print("KERNEL_OK")
</pallas_src>

<mosaic_0001>
module attributes {stable_mosaic.version = 11 : i64} {
  func.func @_matmul_bias_kernel(%arg0: i32, %arg1: memref<512x128xbf16, #tpu.memory_space<vmem>>, %arg2: memref<128x128xbf16, #tpu.memory_space<vmem>>, %arg3: memref<1x128xf32, #tpu.memory_space<vmem>>, %arg4: memref<512x128xf32, #tpu.memory_space<vmem>>) attributes {dimension_semantics = [#tpu.dimension_semantics<parallel>], iteration_bounds = array<i64: 1>, scalar_prefetch = 0 : i64, scratch_operands = 0 : i64, tpu.core_type = #tpu.core_type<tc>, window_params = [{transform_indices = @transform_0, window_bounds = array<i64: 512, 128>}, {pipeline_mode = #tpu.pipeline_mode<synchronous>, transform_indices = @transform_1, window_bounds = array<i64: 128, 128>}, {pipeline_mode = #tpu.pipeline_mode<synchronous>, transform_indices = @transform_2, window_bounds = array<i64: 1, 128>}, {transform_indices = @transform_3, window_bounds = array<i64: 512, 128>}]} {
    %c0 = arith.constant 0 : index
    %c0_0 = arith.constant 0 : index
    %0 = vector.load %arg1[%c0, %c0_0] : memref<512x128xbf16, #tpu.memory_space<vmem>>, vector<512x128xbf16>
    %c0_1 = arith.constant 0 : index
    %c0_2 = arith.constant 0 : index
    %1 = vector.load %arg2[%c0_1, %c0_2] : memref<128x128xbf16, #tpu.memory_space<vmem>>, vector<128x128xbf16>
    %cst = arith.constant dense<0.000000e+00> : vector<512x128xf32>
    %2 = tpu.matmul %0, %1, %cst {dimension_numbers = #tpu.dot_dimension_numbers<[1], [0], [0], [1], [0, 0, 1, 1], [], []>} : vector<512x128xbf16>, vector<128x128xbf16>, vector<512x128xf32> -> vector<512x128xf32>
    %c0_3 = arith.constant 0 : index
    %c0_4 = arith.constant 0 : index
    %3 = vector.load %arg3[%c0_3, %c0_4] : memref<1x128xf32, #tpu.memory_space<vmem>>, vector<1x128xf32>
    %4 = vector.broadcast %3 : vector<1x128xf32> to vector<512x128xf32>
    %5 = arith.addf %2, %4 : vector<512x128xf32>
    %c0_5 = arith.constant 0 : index
    %c0_6 = arith.constant 0 : index
    %6 = vector.load %arg4[%c0_5, %c0_6] : memref<512x128xf32, #tpu.memory_space<vmem>>, vector<512x128xf32>
    tpu.vector_store %arg4[%c0_5, %c0_6], %5 {strides = array<i32>} : memref<512x128xf32, #tpu.memory_space<vmem>>, vector<512x128xf32>,
    return
  }
  func.func @transform_0(%arg0: i32) -> (i32, i32) {
    %c0_i32 = arith.constant 0 : i32
    %c0_i32_0 = arith.constant 0 : i32
    return %arg0, %c0_i32 : i32, i32
  }
  func.func @transform_1(%arg0: i32) -> (i32, i32) {
    %c0_i32 = arith.constant 0 : i32
    %c0_i32_0 = arith.constant 0 : i32
    %c0_i32_1 = arith.constant 0 : i32
    return %c0_i32, %c0_i32_0 : i32, i32
  }
  func.func @transform_2(%arg0: i32) -> (i32, i32) {
    %c0_i32 = arith.constant 0 : i32
    %c0_i32_0 = arith.constant 0 : i32
    %c0_i32_1 = arith.constant 0 : i32
    return %c0_i32, %c0_i32_0 : i32, i32
  }
  func.func @transform_3(%arg0: i32) -> (i32, i32) {
    %c0_i32 = arith.constant 0 : i32
    %c0_i32_0 = arith.constant 0 : i32
    return %arg0, %c0_i32 : i32, i32
  }
}

</mosaic_0001>

<llo_original>
// kernel: modulated_deform_conv_with_off.1
$region0: #{modulated_deform_conv_with_off.1}
  #allocation0 [shape = 'u32[]', space=smem, size = 0x4, offset = 0x4, fixed_abs, tag = 'smem constant byte address 0x4 - core index']
  #allocation1 [shape = 'u32[144,128]{1,0:T(1,128)}', space=vmem, size = 0x12000, scoped, tag = 'internal scratch']
  %s0 = inlined_call_operand.vmem [shape: bf16[512,128], index: 0, kind: input, shape index: {}]
  %s1 = inlined_call_operand.vmem [shape: bf16[128,128], index: 1, kind: input, shape index: {}]
  %s2 = inlined_call_operand.vmem [shape: f32[1,128], index: 2, kind: input, shape index: {}]
  %s3 = inlined_call_operand.vmem [shape: f32[512,128], index: 3, kind: output, shape index: {}]
  %s4 = sld [smem:[#allocation0]]
  $region22: #{modulated_deform_conv_with_off.1} parent=0
    _
  %s6 = ssub.s32 1, %s4
  %s7 = scalar_select 0, %s6, %s4
  // Predicated region
  $region2: #{modulated_deform_conv_with_off.1} parent=0 // pred_check
    _
  $region3: #{modulated_deform_conv_with_off.1} parent=0 // pred_check_branch
    %9 = sbr.rel (0) target = $region5
  $region4: #{modulated_deform_conv_with_off.1} parent=0 // pred_region
    _
  $region5: #{modulated_deform_conv_with_off.1} parent=0 // pred_fallthru
    _
  // Predicated region
  $region6: #{modulated_deform_conv_with_off.1} parent=0 // pred_check
    _
  $region7: #{modulated_deform_conv_with_off.1} parent=0 // pred_check_branch
    %11 = sbr.rel (0) target = $region9
  $region8: #{modulated_deform_conv_with_off.1} parent=0 // pred_region
    _
  $region9: #{modulated_deform_conv_with_off.1} parent=0 // pred_fallthru
    _
  // Predicated region
  $region10: #{modulated_deform_conv_with_off.1} parent=0 // pred_check
    _
  $region11: #{modulated_deform_conv_with_off.1} parent=0 // pred_check_branch
    %13 = sbr.rel (0) target = $region13
  $region12: #{modulated_deform_conv_with_off.1} parent=0 // pred_region
    _
  $region13: #{modulated_deform_conv_with_off.1} parent=0 // pred_fallthru
    _
  %v15 = vld [vmem:[%s0] sm:$0xf]
  %v16 = vld [vmem:[%s0 + $0x4] sm:$0xf]
  %v17 = vld [vmem:[%s0 + $0x8] sm:$0xf]
  %v18 = vld [vmem:[%s0 + $0xc] sm:$0xf]
  %v19 = vld [vmem:[%s0 + $0x10] sm:$0xf]
  %v20 = vld [vmem:[%s0 + $0x14] sm:$0xf]
  %v21 = vld [vmem:[%s0 + $0x18] sm:$0xf]
  %v22 = vld [vmem:[%s0 + $0x1c] sm:$0xf]
  %v23 = vld [vmem:[%s0 + $0x20] sm:$0xf]
  %v24 = vld [vmem:[%s0 + $0x24] sm:$0xf]
  %v25 = vld [vmem:[%s0 + $0x28] sm:$0xf]
  %v26 = vld [vmem:[%s0 + $0x2c] sm:$0xf]
  %v27 = vld [vmem:[%s0 + $0x30] sm:$0xf]
  %v28 = vld [vmem:[%s0 + $0x34] sm:$0xf]
  %v29 = vld [vmem:[%s0 + $0x38] sm:$0xf]
  %v30 = vld [vmem:[%s0 + $0x3c] sm:$0xf]
  %v31 = vld [vmem:[%s0 + $0x40] sm:$0xf]
  %v32 = vld [vmem:[%s0 + $0x44] sm:$0xf]
  %v33 = vld [vmem:[%s0 + $0x48] sm:$0xf]
  %v34 = vld [vmem:[%s0 + $0x4c] sm:$0xf]
  %v35 = vld [vmem:[%s0 + $0x50] sm:$0xf]
  %v36 = vld [vmem:[%s0 + $0x54] sm:$0xf]
  %v37 = vld [vmem:[%s0 + $0x58] sm:$0xf]
  %v38 = vld [vmem:[%s0 + $0x5c] sm:$0xf]
  %v39 = vld [vmem:[%s0 + $0x60] sm:$0xf]
  %v40 = vld [vmem:[%s0 + $0x64] sm:$0xf]
  %v41 = vld [vmem:[%s0 + $0x68] sm:$0xf]
  %v42 = vld [vmem:[%s0 + $0x6c] sm:$0xf]
  %v43 = vld [vmem:[%s0 + $0x70] sm:$0xf]
  %v44 = vld [vmem:[%s0 + $0x74] sm:$0xf]
  %v45 = vld [vmem:[%s0 + $0x78] sm:$0xf]
  %v46 = vld [vmem:[%s0 + $0x7c] sm:$0xf]
  %v47 = vld [vmem:[%s0 + $0x80] sm:$0xf]
  %v48 = vld [vmem:[%s0 + $0x84] sm:$0xf]
  %v49 = vld [vmem:[%s0 + $0x88] sm:$0xf]
  %v50 = vld [vmem:[%s0 + $0x8c] sm:$0xf]
  %v51 = vld [vmem:[%s0 + $0x90] sm:$0xf]
  %v52 = vld [vmem:[%s0 + $0x94] sm:$0xf]
  %v53 = vld [vmem:[%s0 + $0x98] sm:$0xf]
  %v54 = vld [vmem:[%s0 + $0x9c] sm:$0xf]
  %v55 = vld [vmem:[%s0 + $0xa0] sm:$0xf]
  %v56 = vld [vmem:[%s0 + $0xa4] sm:$0xf]
  %v57 = vld [vmem:[%s0 + $0xa8] sm:$0xf]
  %v58 = vld [vmem:[%s0 + $0xac] sm:$0xf]
  %v59 = vld [vmem:[%s0 + $0xb0] sm:$0xf]
  %v60 = vld [vmem:[%s0 + $0xb4] sm:$0xf]
  %v61 = vld [vmem:[%s0 + $0xb8] sm:$0xf]
  %v62 = vld [vmem:[%s0 + $0xbc] sm:$0xf]
  %v63 = vld [vmem:[%s0 + $0xc0] sm:$0xf]
  %v64 = vld [vmem:[%s0 + $0xc4] sm:$0xf]
  %v65 = vld [vmem:[%s0 + $0xc8] sm:$0xf]
  %v66 = vld [vmem:[%s0 + $0xcc] sm:$0xf]
  %v67 = vld [vmem:[%s0 + $0xd0] sm:$0xf]
  %v68 = vld [vmem:[%s0 + $0xd4] sm:$0xf]
  %v69 = vld [vmem:[%s0 + $0xd8] sm:$0xf]
  %v70 = vld [vmem:[%s0 + $0xdc] sm:$0xf]
  %v71 = vld [vmem:[%s0 + $0xe0] sm:$0xf]
  %v72 = vld [vmem:[%s0 + $0xe4] sm:$0xf]
  %v73 = vld [vmem:[%s0 + $0xe8] sm:$0xf]
  %v74 = vld [vmem:[%s0 + $0xec] sm:$0xf]
  %v75 = vld [vmem:[%s0 + $0xf0] sm:$0xf]
  %v76 = vld [vmem:[%s0 + $0xf4] sm:$0xf]
  %v77 = vld [vmem:[%s0 + $0xf8] sm:$0xf]
  %v78 = vld [vmem:[%s0 + $0xfc] sm:$0xf]
  %v79 = vld [vmem:[%s1] sm:$0xf]
  %v80 = vld [vmem:[%s1 + $0x4] sm:$0xf]
  %v81 = vld [vmem:[%s1 + $0x8] sm:$0xf]
  %v82 = vld [vmem:[%s1 + $0xc] sm:$0xf]
  %v83 = vld [vmem:[%s1 + $0x10] sm:$0xf]
  %v84 = vld [vmem:[%s1 + $0x14] sm:$0xf]
  %v85 = vld [vmem:[%s1 + $0x18] sm:$0xf]
  %v86 = vld [vmem:[%s1 + $0x1c] sm:$0xf]
  %v87 = vld [vmem:[%s1 + $0x20] sm:$0xf]
  %v88 = vld [vmem:[%s1 + $0x24] sm:$0xf]
  %v89 = vld [vmem:[%s1 + $0x28] sm:$0xf]
  %v90 = vld [vmem:[%s1 + $0x2c] sm:$0xf]
  %v91 = vld [vmem:[%s1 + $0x30] sm:$0xf]
  %v92 = vld [vmem:[%s1 + $0x34] sm:$0xf]
  %v93 = vld [vmem:[%s1 + $0x38] sm:$0xf]
  %v94 = vld [vmem:[%s1 + $0x3c] sm:$0xf]
  %v95 = vld [vmem:[%s2] sm:$0x1]
  %v97 = vlaneseq
  %v98 = vshrl.u32 %v97, 7
  %v99 = vsub.s32 0, %v98
  %v100 = vrot.slane %v95, %v99
  %v166 = vunpack.c.l.b16 %v15
  %v167 = vunpack.c.l.b16 %v16
  %v168 = vunpack.c.l.b16 %v17
  %v169 = vunpack.c.l.b16 %v18
  %v170 = vunpack.c.l.b16 %v19
  %v171 = vunpack.c.l.b16 %v20
  %v172 = vunpack.c.l.b16 %v21
  %v173 = vunpack.c.l.b16 %v22
  %v174 = vunpack.c.l.b16 %v23
  %v175 = vunpack.c.l.b16 %v24
  %v176 = vunpack.c.l.b16 %v25
  %v177 = vunpack.c.l.b16 %v26
  %v178 = vunpack.c.l.b16 %v27
  %v179 = vunpack.c.l.b16 %v28
  %v180 = vunpack.c.l.b16 %v29
  %v181 = vunpack.c.l.b16 %v30
  %v182 = vunpack.c.l.b16 %v31
  %v183 = vunpack.c.l.b16 %v32
  %v184 = vunpack.c.l.b16 %v33
  %v185 = vunpack.c.l.b16 %v34
  %v186 = vunpack.c.l.b16 %v35
  %v187 = vunpack.c.l.b16 %v36
  %v188 = vunpack.c.l.b16 %v37
  %v189 = vunpack.c.l.b16 %v38
  %v190 = vunpack.c.l.b16 %v39
  %v191 = vunpack.c.l.b16 %v40
  %v192 = vunpack.c.l.b16 %v41
  %v193 = vunpack.c.l.b16 %v42
  %v194 = vunpack.c.l.b16 %v43
  %v195 = vunpack.c.l.b16 %v44
  %v196 = vunpack.c.l.b16 %v45
  %v197 = vunpack.c.l.b16 %v46
  %v198 = vunpack.c.l.b16 %v47
  %v199 = vunpack.c.l.b16 %v48
  %v200 = vunpack.c.l.b16 %v49
  %v201 = vunpack.c.l.b16 %v50
  %v202 = vunpack.c.l.b16 %v51
  %v203 = vunpack.c.l.b16 %v52
  %v204 = vunpack.c.l.b16 %v53
  %v205 = vunpack.c.l.b16 %v54
  %v206 = vunpack.c.l.b16 %v55
  %v207 = vunpack.c.l.b16 %v56
  %v208 = vunpack.c.l.b16 %v57
  %v209 = vunpack.c.l.b16 %v58
  %v210 = vunpack.c.l.b16 %v59
  %v211 = vunpack.c.l.b16 %v60
  %v212 = vunpack.c.l.b16 %v61
  %v213 = vunpack.c.l.b16 %v62
  %v214 = vunpack.c.l.b16 %v63
  %v215 = vunpack.c.l.b16 %v64
  %v216 = vunpack.c.l.b16 %v65
  %v217 = vunpack.c.l.b16 %v66
  %v218 = vunpack.c.l.b16 %v67
  %v219 = vunpack.c.l.b16 %v68
  %v220 = vunpack.c.l.b16 %v69
  %v221 = vunpack.c.l.b16 %v70
  %v222 = vunpack.c.l.b16 %v71
  %v223 = vunpack.c.l.b16 %v72
  %v224 = vunpack.c.l.b16 %v73
  %v225 = vunpack.c.l.b16 %v74
  %v226 = vunpack.c.l.b16 %v75
  %v227 = vunpack.c.l.b16 %v76
  %v228 = vunpack.c.l.b16 %v77
  %v229 = vunpack.c.l.b16 %v78
  %v230 = vpack.c.b16 %v167, %v166
  %v231 = vpack.c.b16 %v169, %v168
  %v232 = vpack.c.b16 %v171, %v170
  %v233 = vpack.c.b16 %v173, %v172
  %v234 = vpack.c.b16 %v175, %v174
  %v235 = vpack.c.b16 %v177, %v176
  %v236 = vpack.c.b16 %v179, %v178
  %v237 = vpack.c.b16 %v181, %v180
  %v238 = vpack.c.b16 %v183, %v182
  %v239 = vpack.c.b16 %v185, %v184
  %v240 = vpack.c.b16 %v187, %v186
  %v241 = vpack.c.b16 %v189, %v188
  %v242 = vpack.c.b16 %v191, %v190
  %v243 = vpack.c.b16 %v193, %v192
  %v244 = vpack.c.b16 %v195, %v194
  %v245 = vpack.c.b16 %v197, %v196
  %v246 = vpack.c.b16 %v199, %v198
  %v247 = vpack.c.b16 %v201, %v200
  %v248 = vpack.c.b16 %v203, %v202
  %v249 = vpack.c.b16 %v205, %v204
  %v250 = vpack.c.b16 %v207, %v206
  %v251 = vpack.c.b16 %v209, %v208
  %v252 = vpack.c.b16 %v211, %v210
  %v253 = vpack.c.b16 %v213, %v212
  %v254 = vpack.c.b16 %v215, %v214
  %v255 = vpack.c.b16 %v217, %v216
  %v256 = vpack.c.b16 %v219, %v218
  %v257 = vpack.c.b16 %v221, %v220
  %v258 = vpack.c.b16 %v223, %v222
  %v259 = vpack.c.b16 %v225, %v224
  %v260 = vpack.c.b16 %v227, %v226
  %v261 = vpack.c.b16 %v229, %v228
  %v310 = vunpack.c.l.b16 %v79
  %v311 = vunpack.c.l.b16 %v80
  %v312 = vunpack.c.l.b16 %v81
  %v313 = vunpack.c.l.b16 %v82
  %v314 = vunpack.c.l.b16 %v83
  %v315 = vunpack.c.l.b16 %v84
  %v316 = vunpack.c.l.b16 %v85
  %v317 = vunpack.c.l.b16 %v86
  %v318 = vunpack.c.l.b16 %v87
  %v319 = vunpack.c.l.b16 %v88
  %v320 = vunpack.c.l.b16 %v89
  %v321 = vunpack.c.l.b16 %v90
  %v322 = vunpack.c.l.b16 %v91
  %v323 = vunpack.c.l.b16 %v92
  %v324 = vunpack.c.l.b16 %v93
  %v325 = vunpack.c.l.b16 %v94
  %v326 = vpack.c.b16 %v311, %v310
  %v327 = vpack.c.b16 %v313, %v312
  %v328 = vpack.c.b16 %v315, %v314
  %v329 = vpack.c.b16 %v317, %v316
  %v330 = vpack.c.b16 %v319, %v318
  %v331 = vpack.c.b16 %v321, %v320
  %v332 = vpack.c.b16 %v323, %v322
  %v333 = vpack.c.b16 %v325, %v324
  %342 = vmatprep.subr.bf16.mxu0 0
  %343 = vmatpush1.bf16.msra.mxu0 %v326
  %344 = vmatprep.subr.bf16.mxu0 0
  %345 = vmatpush1.bf16.msra.mxu0 %v327
  %346 = vmatprep.subr.bf16.mxu0 0
  %347 = vmatpush1.bf16.msra.mxu0 %v328
  %348 = vmatprep.subr.bf16.mxu0 0
  %349 = vmatpush1.bf16.msra.mxu0 %v329
  %350 = vmatprep.subr.bf16.mxu0 0
  %351 = vmatpush1.bf16.msra.mxu0 %v330
  %352 = vmatprep.subr.bf16.mxu0 0
  %353 = vmatpush1.bf16.msra.mxu0 %v331
  %354 = vmatprep.subr.bf16.mxu0 0
  %355 = vmatpush1.bf16.msra.mxu0 %v332
  %356 = vmatprep.subr.bf16.mxu0 0
  %357 = vmatpush1.bf16.msra.mxu0 %v333
  %358 = vmatprep.subr.bf16.mxu0 0
  %359 = vmatpush1.bf16.msra.mxu0 0
  %360 = vmatprep.subr.bf16.mxu0 0
  %361 = vmatpush1.bf16.msra.mxu0 0
  %362 = vmatprep.subr.bf16.mxu0 0
  %363 = vmatpush1.bf16.msra.mxu0 0
  %364 = vmatprep.subr.bf16.mxu0 0
  %365 = vmatpush1.bf16.msra.mxu0 0
  %366 = vmatprep.subr.bf16.mxu0 0
  %367 = vmatpush1.bf16.msra.mxu0 0
  %368 = vmatprep.subr.bf16.mxu0 0
  %369 = vmatpush1.bf16.msra.mxu0 0
  %370 = vmatprep.subr.bf16.mxu0 0
  %371 = vmatpush1.bf16.msra.mxu0 0
  %372 = vmatprep.subr.bf16.mxu0 0
  %373 = vmatpush1.bf16.msra.mxu0 0
  %374 = vmatprep.mubr.bf16.mxu0 0
  %375 = vmatmul.mubr.bf16.gmra.mrb[0].mxu0 %v230
  %v376 = vpop.f32.mrb[0].mxu0
  %v377 = vadd.f32 %v100, %v376
  %v378 = vpop.f32.mrb[0].mxu0
  %v379 = vpop.f32.mrb[0].mxu0
  %v380 = vadd.f32 %v100, %v379
  %v381 = vpop.f32.mrb[0].mxu0
  %382 = vmatprep.mubr.bf16.mxu0 0
  %383 = vmatmul.mubr.bf16.gmra.mrb[0].mxu0 %v231
  %v384 = vpop.f32.mrb[0].mxu0
  %v385 = vadd.f32 %v100, %v384
  %v386 = vpop.f32.mrb[0].mxu0
  %v387 = vpop.f32.mrb[0].mxu0
  %v388 = vadd.f32 %v100, %v387
  %v389 = vpop.f32.mrb[0].mxu0
  %390 = vmatprep.mubr.bf16.mxu0 0
  %391 = vmatmul.mubr.bf16.gmra.mrb[0].mxu0 %v232
  %v392 = vpop.f32.mrb[0].mxu0
  %v393 = vadd.f32 %v100, %v392
  %v394 = vpop.f32.mrb[0].mxu0
  %v395 = vpop.f32.mrb[0].mxu0
  %v396 = vadd.f32 %v100, %v395
  %v397 = vpop.f32.mrb[0].mxu0
  %398 = vmatprep.mubr.bf16.mxu0 0
  %399 = vmatmul.mubr.bf16.gmra.mrb[0].mxu0 %v233
  %v400 = vpop.f32.mrb[0].mxu0
  %v401 = vadd.f32 %v100, %v400
  %v402 = vpop.f32.mrb[0].mxu0
  %v403 = vpop.f32.mrb[0].mxu0
  %v404 = vadd.f32 %v100, %v403
  %v405 = vpop.f32.mrb[0].mxu0
  %406 = vmatprep.mubr.bf16.mxu0 0
  %407 = vmatmul.mubr.bf16.gmra.mrb[0].mxu0 %v234
  %v408 = vpop.f32.mrb[0].mxu0
  %v409 = vadd.f32 %v100, %v408
  %v410 = vpop.f32.mrb[0].mxu0
  %v411 = vpop.f32.mrb[0].mxu0
  %v412 = vadd.f32 %v100, %v411
  %v413 = vpop.f32.mrb[0].mxu0
  %414 = vmatprep.mubr.bf16.mxu0 0
  %415 = vmatmul.mubr.bf16.gmra.mrb[0].mxu0 %v235
  %v416 = vpop.f32.mrb[0].mxu0
  %v417 = vadd.f32 %v100, %v416
  %v418 = vpop.f32.mrb[0].mxu0
  %v419 = vpop.f32.mrb[0].mxu0
  %v420 = vadd.f32 %v100, %v419
  %v421 = vpop.f32.mrb[0].mxu0
  %422 = vmatprep.mubr.bf16.mxu0 0
  %423 = vmatmul.mubr.bf16.gmra.mrb[0].mxu0 %v236
  %v424 = vpop.f32.mrb[0].mxu0
  %v425 = vadd.f32 %v100, %v424
  %v426 = vpop.f32.mrb[0].mxu0
  %v427 = vpop.f32.mrb[0].mxu0
  %v428 = vadd.f32 %v100, %v427
  %v429 = vpop.f32.mrb[0].mxu0
  %430 = vmatprep.mubr.bf16.mxu0 0
  %431 = vmatmul.mubr.bf16.gmra.mrb[0].mxu0 %v237
  %v432 = vpop.f32.mrb[0].mxu0
  %v433 = vadd.f32 %v100, %v432
  %v434 = vpop.f32.mrb[0].mxu0
  %v435 = vpop.f32.mrb[0].mxu0
  %v436 = vadd.f32 %v100, %v435
  %v437 = vpop.f32.mrb[0].mxu0
  %438 = vmatprep.mubr.bf16.mxu0 0
  %439 = vmatmul.mubr.bf16.gmra.mrb[0].mxu0 %v238
  %v440 = vpop.f32.mrb[0].mxu0
  %v441 = vadd.f32 %v100, %v440
  %v442 = vpop.f32.mrb[0].mxu0
  %v443 = vpop.f32.mrb[0].mxu0
  %v444 = vadd.f32 %v100, %v443
  %v445 = vpop.f32.mrb[0].mxu0
  %446 = vmatprep.mubr.bf16.mxu0 0
  %447 = vmatmul.mubr.bf16.gmra.mrb[0].mxu0 %v239
  %v448 = vpop.f32.mrb[0].mxu0
  %v449 = vadd.f32 %v100, %v448
  %v450 = vpop.f32.mrb[0].mxu0
  %v451 = vpop.f32.mrb[0].mxu0
  %v452 = vadd.f32 %v100, %v451
  %v453 = vpop.f32.mrb[0].mxu0
  %454 = vmatprep.mubr.bf16.mxu0 0
  %455 = vmatmul.mubr.bf16.gmra.mrb[0].mxu0 %v240
  %v456 = vpop.f32.mrb[0].mxu0
  %v457 = vadd.f32 %v100, %v456
  %v458 = vpop.f32.mrb[0].mxu0
  %v459 = vpop.f32.mrb[0].mxu0
  %v460 = vadd.f32 %v100, %v459
  %v461 = vpop.f32.mrb[0].mxu0
  %462 = vmatprep.mubr.bf16.mxu0 0
  %463 = vmatmul.mubr.bf16.gmra.mrb[0].mxu0 %v241
  %v464 = vpop.f32.mrb[0].mxu0
  %v465 = vadd.f32 %v100, %v464
  %v466 = vpop.f32.mrb[0].mxu0
  %v467 = vpop.f32.mrb[0].mxu0
  %v468 = vadd.f32 %v100, %v467
  %v469 = vpop.f32.mrb[0].mxu0
  %470 = vmatprep.mubr.bf16.mxu0 0
  %471 = vmatmul.mubr.bf16.gmra.mrb[0].mxu0 %v242
  %v472 = vpop.f32.mrb[0].mxu0
  %v473 = vadd.f32 %v100, %v472
  %v474 = vpop.f32.mrb[0].mxu0
  %v475 = vpop.f32.mrb[0].mxu0
  %v476 = vadd.f32 %v100, %v475
  %v477 = vpop.f32.mrb[0].mxu0
  %478 = vmatprep.mubr.bf16.mxu0 0
  %479 = vmatmul.mubr.bf16.gmra.mrb[0].mxu0 %v243
  %v480 = vpop.f32.mrb[0].mxu0
  %v481 = vadd.f32 %v100, %v480
  %v482 = vpop.f32.mrb[0].mxu0
  %v483 = vpop.f32.mrb[0].mxu0
  %v484 = vadd.f32 %v100, %v483
  %v485 = vpop.f32.mrb[0].mxu0
  %486 = vmatprep.mubr.bf16.mxu0 0
  %487 = vmatmul.mubr.bf16.gmra.mrb[0].mxu0 %v244
  %v488 = vpop.f32.mrb[0].mxu0
  %v489 = vadd.f32 %v100, %v488
  %v490 = vpop.f32.mrb[0].mxu0
  %v491 = vpop.f32.mrb[0].mxu0
  %v492 = vadd.f32 %v100, %v491
  %v493 = vpop.f32.mrb[0].mxu0
  %494 = vmatprep.mubr.bf16.mxu0 0
  %495 = vmatmul.mubr.bf16.gmra.mrb[0].mxu0 %v245
  %v496 = vpop.f32.mrb[0].mxu0
  %v497 = vadd.f32 %v100, %v496
  %v498 = vpop.f32.mrb[0].mxu0
  %v499 = vpop.f32.mrb[0].mxu0
  %v500 = vadd.f32 %v100, %v499
  %v501 = vpop.f32.mrb[0].mxu0
  %502 = vmatprep.mubr.bf16.mxu0 0
  %503 = vmatmul.mubr.bf16.gmra.mrb[0].mxu0 %v246
  %v504 = vpop.f32.mrb[0].mxu0
  %v505 = vadd.f32 %v100, %v504
  %v506 = vpop.f32.mrb[0].mxu0
  %v507 = vpop.f32.mrb[0].mxu0
  %v508 = vadd.f32 %v100, %v507
  %v509 = vpop.f32.mrb[0].mxu0
  %510 = vmatprep.mubr.bf16.mxu0 0
  %511 = vmatmul.mubr.bf16.gmra.mrb[0].mxu0 %v247
  %v512 = vpop.f32.mrb[0].mxu0
  %v513 = vadd.f32 %v100, %v512
  %v514 = vpop.f32.mrb[0].mxu0
  %v515 = vpop.f32.mrb[0].mxu0
  %v516 = vadd.f32 %v100, %v515
  %v517 = vpop.f32.mrb[0].mxu0
  %518 = vmatprep.mubr.bf16.mxu0 0
  %519 = vmatmul.mubr.bf16.gmra.mrb[0].mxu0 %v248
  %v520 = vpop.f32.mrb[0].mxu0
  %v521 = vadd.f32 %v100, %v520
  %v522 = vpop.f32.mrb[0].mxu0
  %v523 = vpop.f32.mrb[0].mxu0
  %v524 = vadd.f32 %v100, %v523
  %v525 = vpop.f32.mrb[0].mxu0
  %526 = vmatprep.mubr.bf16.mxu0 0
  %527 = vmatmul.mubr.bf16.gmra.mrb[0].mxu0 %v249
  %v528 = vpop.f32.mrb[0].mxu0
  %v529 = vadd.f32 %v100, %v528
  %v530 = vpop.f32.mrb[0].mxu0
  %v531 = vpop.f32.mrb[0].mxu0
  %v532 = vadd.f32 %v100, %v531
  %v533 = vpop.f32.mrb[0].mxu0
  %534 = vmatprep.mubr.bf16.mxu0 0
  %535 = vmatmul.mubr.bf16.gmra.mrb[0].mxu0 %v250
  %v536 = vpop.f32.mrb[0].mxu0
  %v537 = vadd.f32 %v100, %v536
  %v538 = vpop.f32.mrb[0].mxu0
  %v539 = vpop.f32.mrb[0].mxu0
  %v540 = vadd.f32 %v100, %v539
  %v541 = vpop.f32.mrb[0].mxu0
  %542 = vmatprep.mubr.bf16.mxu0 0
  %543 = vmatmul.mubr.bf16.gmra.mrb[0].mxu0 %v251
  %v544 = vpop.f32.mrb[0].mxu0
  %v545 = vadd.f32 %v100, %v544
  %v546 = vpop.f32.mrb[0].mxu0
  %v547 = vpop.f32.mrb[0].mxu0
  %v548 = vadd.f32 %v100, %v547
  %v549 = vpop.f32.mrb[0].mxu0
  %550 = vmatprep.mubr.bf16.mxu0 0
  %551 = vmatmul.mubr.bf16.gmra.mrb[0].mxu0 %v252
  %v552 = vpop.f32.mrb[0].mxu0
  %v553 = vadd.f32 %v100, %v552
  %v554 = vpop.f32.mrb[0].mxu0
  %v555 = vpop.f32.mrb[0].mxu0
  %v556 = vadd.f32 %v100, %v555
  %v557 = vpop.f32.mrb[0].mxu0
  %558 = vmatprep.mubr.bf16.mxu0 0
  %559 = vmatmul.mubr.bf16.gmra.mrb[0].mxu0 %v253
  %v560 = vpop.f32.mrb[0].mxu0
  %v561 = vadd.f32 %v100, %v560
  %v562 = vpop.f32.mrb[0].mxu0
  %v563 = vpop.f32.mrb[0].mxu0
  %v564 = vadd.f32 %v100, %v563
  %v565 = vpop.f32.mrb[0].mxu0
  %566 = vmatprep.mubr.bf16.mxu0 0
  %567 = vmatmul.mubr.bf16.gmra.mrb[0].mxu0 %v254
  %v568 = vpop.f32.mrb[0].mxu0
  %v569 = vadd.f32 %v100, %v568
  %v570 = vpop.f32.mrb[0].mxu0
  %v571 = vpop.f32.mrb[0].mxu0
  %v572 = vadd.f32 %v100, %v571
  %v573 = vpop.f32.mrb[0].mxu0
  %574 = vmatprep.mubr.bf16.mxu0 0
  %575 = vmatmul.mubr.bf16.gmra.mrb[0].mxu0 %v255
  %v576 = vpop.f32.mrb[0].mxu0
  %v577 = vadd.f32 %v100, %v576
  %v578 = vpop.f32.mrb[0].mxu0
  %v579 = vpop.f32.mrb[0].mxu0
  %v580 = vadd.f32 %v100, %v579
  %v581 = vpop.f32.mrb[0].mxu0
  %582 = vmatprep.mubr.bf16.mxu0 0
  %583 = vmatmul.mubr.bf16.gmra.mrb[0].mxu0 %v256
  %v584 = vpop.f32.mrb[0].mxu0
  %v585 = vadd.f32 %v100, %v584
  %v586 = vpop.f32.mrb[0].mxu0
  %v587 = vpop.f32.mrb[0].mxu0
  %v588 = vadd.f32 %v100, %v587
  %v589 = vpop.f32.mrb[0].mxu0
  %590 = vmatprep.mubr.bf16.mxu0 0
  %591 = vmatmul.mubr.bf16.gmra.mrb[0].mxu0 %v257
  %v592 = vpop.f32.mrb[0].mxu0
  %v593 = vadd.f32 %v100, %v592
  %v594 = vpop.f32.mrb[0].mxu0
  %v595 = vpop.f32.mrb[0].mxu0
  %v596 = vadd.f32 %v100, %v595
  %v597 = vpop.f32.mrb[0].mxu0
  %598 = vmatprep.mubr.bf16.mxu0 0
  %599 = vmatmul.mubr.bf16.gmra.mrb[0].mxu0 %v258
  %v600 = vpop.f32.mrb[0].mxu0
  %v601 = vadd.f32 %v100, %v600
  %v602 = vpop.f32.mrb[0].mxu0
  %v603 = vpop.f32.mrb[0].mxu0
  %v604 = vadd.f32 %v100, %v603
  %v605 = vpop.f32.mrb[0].mxu0
  %606 = vmatprep.mubr.bf16.mxu0 0
  %607 = vmatmul.mubr.bf16.gmra.mrb[0].mxu0 %v259
  %v608 = vpop.f32.mrb[0].mxu0
  %v609 = vadd.f32 %v100, %v608
  %v610 = vpop.f32.mrb[0].mxu0
  %v611 = vpop.f32.mrb[0].mxu0
  %v612 = vadd.f32 %v100, %v611
  %v613 = vpop.f32.mrb[0].mxu0
  %614 = vmatprep.mubr.bf16.mxu0 0
  %615 = vmatmul.mubr.bf16.gmra.mrb[0].mxu0 %v260
  %v616 = vpop.f32.mrb[0].mxu0
  %v617 = vadd.f32 %v100, %v616
  %v618 = vpop.f32.mrb[0].mxu0
  %v619 = vpop.f32.mrb[0].mxu0
  %v620 = vadd.f32 %v100, %v619
  %v621 = vpop.f32.mrb[0].mxu0
  %622 = vmatprep.mubr.bf16.mxu0 0
  %623 = vmatmul.mubr.bf16.gmra.mrb[0].mxu0 %v261
  %v624 = vpop.f32.mrb[0].mxu0
  %v625 = vadd.f32 %v100, %v624
  %v626 = vpop.f32.mrb[0].mxu0
  %v627 = vpop.f32.mrb[0].mxu0
  %v628 = vadd.f32 %v100, %v627
  %v629 = vpop.f32.mrb[0].mxu0
  %630 = vdwg.mxu0
  %631 = vst [vmem:[%s3] sm:$0xff] %v377
  %632 = vst [vmem:[%s3 + $0x8] sm:$0xff] %v380
  %633 = vst [vmem:[%s3 + $0x10] sm:$0xff] %v385
  %634 = vst [vmem:[%s3 + $0x18] sm:$0xff] %v388
  %635 = vst [vmem:[%s3 + $0x20] sm:$0xff] %v393
  %636 = vst [vmem:[%s3 + $0x28] sm:$0xff] %v396
  %637 = vst [vmem:[%s3 + $0x30] sm:$0xff] %v401
  %638 = vst [vmem:[%s3 + $0x38] sm:$0xff] %v404
  %639 = vst [vmem:[%s3 + $0x40] sm:$0xff] %v409
  %640 = vst [vmem:[%s3 + $0x48] sm:$0xff] %v412
  %641 = vst [vmem:[%s3 + $0x50] sm:$0xff] %v417
  %642 = vst [vmem:[%s3 + $0x58] sm:$0xff] %v420
  %643 = vst [vmem:[%s3 + $0x60] sm:$0xff] %v425
  %644 = vst [vmem:[%s3 + $0x68] sm:$0xff] %v428
  %645 = vst [vmem:[%s3 + $0x70] sm:$0xff] %v433
  %646 = vst [vmem:[%s3 + $0x78] sm:$0xff] %v436
  %647 = vst [vmem:[%s3 + $0x80] sm:$0xff] %v441
  %648 = vst [vmem:[%s3 + $0x88] sm:$0xff] %v444
  %649 = vst [vmem:[%s3 + $0x90] sm:$0xff] %v449
  %650 = vst [vmem:[%s3 + $0x98] sm:$0xff] %v452
  %651 = vst [vmem:[%s3 + $0xa0] sm:$0xff] %v457
  %652 = vst [vmem:[%s3 + $0xa8] sm:$0xff] %v460
  %653 = vst [vmem:[%s3 + $0xb0] sm:$0xff] %v465
  %654 = vst [vmem:[%s3 + $0xb8] sm:$0xff] %v468
  %655 = vst [vmem:[%s3 + $0xc0] sm:$0xff] %v473
  %656 = vst [vmem:[%s3 + $0xc8] sm:$0xff] %v476
  %657 = vst [vmem:[%s3 + $0xd0] sm:$0xff] %v481
  %658 = vst [vmem:[%s3 + $0xd8] sm:$0xff] %v484
  %659 = vst [vmem:[%s3 + $0xe0] sm:$0xff] %v489
  %660 = vst [vmem:[%s3 + $0xe8] sm:$0xff] %v492
  %661 = vst [vmem:[%s3 + $0xf0] sm:$0xff] %v497
  %662 = vst [vmem:[%s3 + $0xf8] sm:$0xff] %v500
  %663 = vst [vmem:[%s3 + $0x100] sm:$0xff] %v505
  %664 = vst [vmem:[%s3 + $0x108] sm:$0xff] %v508
  %665 = vst [vmem:[%s3 + $0x110] sm:$0xff] %v513
  %666 = vst [vmem:[%s3 + $0x118] sm:$0xff] %v516
  %667 = vst [vmem:[%s3 + $0x120] sm:$0xff] %v521
  %668 = vst [vmem:[%s3 + $0x128] sm:$0xff] %v524
  %669 = vst [vmem:[%s3 + $0x130] sm:$0xff] %v529
  %670 = vst [vmem:[%s3 + $0x138] sm:$0xff] %v532
  %671 = vst [vmem:[%s3 + $0x140] sm:$0xff] %v537
  %672 = vst [vmem:[%s3 + $0x148] sm:$0xff] %v540
  %673 = vst [vmem:[%s3 + $0x150] sm:$0xff] %v545
  %674 = vst [vmem:[%s3 + $0x158] sm:$0xff] %v548
  %675 = vst [vmem:[%s3 + $0x160] sm:$0xff] %v553
  %676 = vst [vmem:[%s3 + $0x168] sm:$0xff] %v556
  %677 = vst [vmem:[%s3 + $0x170] sm:$0xff] %v561
  %678 = vst [vmem:[%s3 + $0x178] sm:$0xff] %v564
  %679 = vst [vmem:[%s3 + $0x180] sm:$0xff] %v569
  %680 = vst [vmem:[%s3 + $0x188] sm:$0xff] %v572
  %681 = vst [vmem:[%s3 + $0x190] sm:$0xff] %v577
  %682 = vst [vmem:[%s3 + $0x198] sm:$0xff] %v580
  %683 = vst [vmem:[%s3 + $0x1a0] sm:$0xff] %v585
  %684 = vst [vmem:[%s3 + $0x1a8] sm:$0xff] %v588
  %685 = vst [vmem:[%s3 + $0x1b0] sm:$0xff] %v593
  %686 = vst [vmem:[%s3 + $0x1b8] sm:$0xff] %v596
  %687 = vst [vmem:[%s3 + $0x1c0] sm:$0xff] %v601
  %688 = vst [vmem:[%s3 + $0x1c8] sm:$0xff] %v604
  %689 = vst [vmem:[%s3 + $0x1d0] sm:$0xff] %v609
  %690 = vst [vmem:[%s3 + $0x1d8] sm:$0xff] %v612
  %691 = vst [vmem:[%s3 + $0x1e0] sm:$0xff] %v617
  %692 = vst [vmem:[%s3 + $0x1e8] sm:$0xff] %v620
  %693 = vst [vmem:[%s3 + $0x1f0] sm:$0xff] %v625
  %694 = vst [vmem:[%s3 + $0x1f8] sm:$0xff] %v628
  // Predicated region
  $region14: #{modulated_deform_conv_with_off.1} parent=0 // pred_check
    _
  $region15: #{modulated_deform_conv_with_off.1} parent=0 // pred_check_branch
    %696 = sbr.rel (0) target = $region17
  $region16: #{modulated_deform_conv_with_off.1} parent=0 // pred_region
    _
  $region17: #{modulated_deform_conv_with_off.1} parent=0 // pred_fallthru
    _
  // Predicated region
  $region18: #{modulated_deform_conv_with_off.1} parent=0 // pred_check
    _
  $region19: #{modulated_deform_conv_with_off.1} parent=0 // pred_check_branch
    %698 = sbr.rel (0) target = $region21
  $region20: #{modulated_deform_conv_with_off.1} parent=0 // pred_region
    _
  $region21: #{modulated_deform_conv_with_off.1} parent=0 // pred_fallthru
    _

</llo_original>
